<compile_context>
chip_gen: v5e
topology: v5e:2x2
jax: 0.10.0
libtpu: 0.0.40
codegen_flags: <defaults>
</compile_context>

<pallas_src>
import jax
import jax.numpy as jnp
from jax.experimental import pallas as pl
from jax.experimental.pallas import tpu as pltpu

F = 32           # features[-1]  (features = [32, 32, 32])
N = 8            # demo batch / number of collocation points
TILE_N = 256     # batch (lane) tile per grid step


def spinn_kernel(xin_ref, w1b_ref, w23_ref, wcf_ref, out_ref):
    # xin_ref: (8, T)         rows = [t, x, y, 1, 0, 0, 0, 0]
    # w1b_ref: (3F, 8)        block-diag W1^T in cols 0..2, packed b1 in col 3
    # w23_ref: (2, 3F, 3F+1)  [k] = [block-diag W_{k+2}^T | b_{k+2}]
    # wcf_ref: (F, 4F+4)      [Wc1^T | Wc2a^T | Wc2b^T | bc1 | bc2 | wf | bf]
    # out_ref: (1, T)         lane-dense output (N on lanes)
    xin = xin_ref[...]

    # Packed first layer; bias folded through the ones row of xin.  (3F, T)
    h = jnp.tanh(jnp.dot(w1b_ref[...], xin, preferred_element_type=jnp.float32))

    # Packed hidden layers 2 and 3 (block-diagonal -> one MXU push each).
    w2 = w23_ref[0, :, 0:3 * F]
    b2 = w23_ref[0, :, 3 * F:3 * F + 1]
    h = jnp.tanh(jnp.dot(w2, h, preferred_element_type=jnp.float32) + b2)
    w3 = w23_ref[1, :, 0:3 * F]
    b3 = w23_ref[1, :, 3 * F:3 * F + 1]
    h = jnp.tanh(jnp.dot(w3, h, preferred_element_type=jnp.float32) + b3)
    # h rows: [0,F) = t_features^T, [F,2F) = x_features^T, [2F,3F) = y_features^T

    wcf = wcf_ref[...]
    wc1t = wcf[:, 0:2 * F]                 # (F, 2F)  acts on cat([t_feat, x_feat])
    wc2at = wcf[:, 2 * F:3 * F]            # (F, F)   acts on c1
    wc2bt = wcf[:, 3 * F:4 * F]            # (F, F)   acts on y_feat
    bc1 = wcf[:, 4 * F:4 * F + 1]          # (F, 1)
    bc2 = wcf[:, 4 * F + 1:4 * F + 2]      # (F, 1)
    wf = wcf[:, 4 * F + 2:4 * F + 3]       # (F, 1)
    bf = wcf[0:1, 4 * F + 3:4 * F + 4]     # (1, 1)

    # combine_layer1 on cat([t_feat, x_feat]) == rows [0, 2F) of h (no concat needed).
    c1 = jnp.tanh(
        jnp.dot(wc1t, h[0:2 * F, :], preferred_element_type=jnp.float32) + bc1)
    # combine_layer2 on cat([c1, y_feat]) via split matmul (exact).
    c2 = jnp.tanh(
        jnp.dot(wc2at, c1, preferred_element_type=jnp.float32)
        + jnp.dot(wc2bt, h[2 * F:3 * F, :], preferred_element_type=jnp.float32)
        + bc2)
    # final_layer Linear(F, 1): VPU multiply + sublane reduce -> lane-dense (1, T).
    out_ref[...] = jnp.sum(c2 * wf, axis=0, keepdims=True) + bf


def pack_params(params):
    """Pack the 13 per-layer parameters into 3 dense feature-major slabs."""
    f = F
    # --- layer 1: block-diag W1^T with b1 folded into column 3 (ones row of input).
    w1b = jnp.zeros((3 * f, 8), jnp.float32)
    for k in range(3):
        w1b = w1b.at[k * f:(k + 1) * f, k].set(params["w1"][k][0])
        w1b = w1b.at[k * f:(k + 1) * f, 3].set(params["b1"][k][0])

    # --- layers 2/3: block-diag W^T with bias appended as the last column.
    def bd_t(w, b):
        m = jnp.zeros((3 * f, 3 * f + 1), jnp.float32)
        for k in range(3):
            m = m.at[k * f:(k + 1) * f, k * f:(k + 1) * f].set(w[k].T)
            m = m.at[k * f:(k + 1) * f, 3 * f].set(b[k][0])
        return m

    w23 = jnp.stack(
        [bd_t(params["w2"], params["b2"]), bd_t(params["w3"], params["b3"])], axis=0)

    # --- combine layers + final layer, packed along lanes.
    wcf = jnp.zeros((f, 4 * f + 4), jnp.float32)
    wcf = wcf.at[:, 0:2 * f].set(params["wc1"].T)                 # (F, 2F)
    wcf = wcf.at[:, 2 * f:3 * f].set(params["wc2"][0:f].T)        # acts on c1
    wcf = wcf.at[:, 3 * f:4 * f].set(params["wc2"][f:2 * f].T)    # acts on y_feat
    wcf = wcf.at[:, 4 * f].set(params["bc1"][0])
    wcf = wcf.at[:, 4 * f + 1].set(params["bc2"][0])
    wcf = wcf.at[:, 4 * f + 2].set(params["wf"][:, 0])
    wcf = wcf.at[0, 4 * f + 3].set(params["bf"][0, 0])
    return w1b, w23, wcf


def spinn_forward(t, x, y, params, tile_n=TILE_N):
    """t, x, y: shape (N,) or (N, 1). Returns shape (N,) like PyTorch squeeze(-1)."""
    def ensure_1d(a):
        return a if a.ndim == 1 else a[:, 0]

    t1, x1, y1 = ensure_1d(t), ensure_1d(x), ensure_1d(y)
    n = t1.shape[0]
    n_pad = ((n + tile_n - 1) // tile_n) * tile_n

    # Lane-dense input slab: rows [t, x, y, 1(bias), 0, 0, 0, 0], N on lanes.
    xin = jnp.zeros((8, n_pad), jnp.float32)
    xin = xin.at[0, :n].set(t1.astype(jnp.float32))
    xin = xin.at[1, :n].set(x1.astype(jnp.float32))
    xin = xin.at[2, :n].set(y1.astype(jnp.float32))
    xin = xin.at[3, :].set(1.0)

    w1b, w23, wcf = pack_params(params)
    grid = (n_pad // tile_n,)

    out = pl.pallas_call(
        spinn_kernel,
        out_shape=jax.ShapeDtypeStruct((1, n_pad), jnp.float32),
        grid_spec=pltpu.PrefetchScalarGridSpec(
            num_scalar_prefetch=0,
            grid=grid,
            in_specs=[
                pl.BlockSpec((8, tile_n), lambda i: (0, i)),            # batch-tiled
                pl.BlockSpec((3 * F, 8), lambda i: (0, 0)),             # resident
                pl.BlockSpec((2, 3 * F, 3 * F + 1), lambda i: (0, 0, 0)),  # resident
                pl.BlockSpec((F, 4 * F + 4), lambda i: (0, 0)),         # resident
            ],
            out_specs=pl.BlockSpec((1, tile_n), lambda i: (0, i)),
        ),
        compiler_params=pltpu.CompilerParams(
            dimension_semantics=("parallel",)),
    )(xin, w1b, w23, wcf)
    return out[0, :n]


def init_params(key):
    """Deterministic synthetic weights, stored pre-transposed as (in, out)
    so the batch-major reference computes x @ W + b (== PyTorch x @ W_pt.T + b)."""
    ks = jax.random.split(key, 13)
    s = 0.3
    return {
        "w1": s * jax.random.normal(ks[0], (3, 1, F), jnp.float32),
        "b1": s * jax.random.normal(ks[1], (3, 1, F), jnp.float32),
        "w2": s * jax.random.normal(ks[2], (3, F, F), jnp.float32),
        "b2": s * jax.random.normal(ks[3], (3, 1, F), jnp.float32),
        "w3": s * jax.random.normal(ks[4], (3, F, F), jnp.float32),
        "b3": s * jax.random.normal(ks[5], (3, 1, F), jnp.float32),
        "wc1": s * jax.random.normal(ks[6], (2 * F, F), jnp.float32),
        "bc1": s * jax.random.normal(ks[7], (1, F), jnp.float32),
        "wc2": s * jax.random.normal(ks[8], (2 * F, F), jnp.float32),
        "bc2": s * jax.random.normal(ks[9], (1, F), jnp.float32),
        "wf": s * jax.random.normal(ks[10], (F, 1), jnp.float32),
        "bf": s * jax.random.normal(ks[11], (1, 1), jnp.float32),
    }


def spinn_reference(t, x, y, params):
    """Pure-JAX reference mirroring the PyTorch forward exactly."""
    def ensure_2d(a):
        return a[:, None] if a.ndim == 1 else a

    def branch(v, k):
        h = jnp.tanh(v @ params["w1"][k] + params["b1"][k])
        h = jnp.tanh(h @ params["w2"][k] + params["b2"][k])
        h = jnp.tanh(h @ params["w3"][k] + params["b3"][k])
        return h

    t_f = branch(ensure_2d(t), 0)
    x_f = branch(ensure_2d(x), 1)
    y_f = branch(ensure_2d(y), 2)
    c = jnp.concatenate([t_f, x_f], axis=1)
    c = jnp.tanh(c @ params["wc1"] + params["bc1"])
    c = jnp.concatenate([c, y_f], axis=1)
    c = jnp.tanh(c @ params["wc2"] + params["bc2"])
    out = c @ params["wf"] + params["bf"]
    return out[:, 0]


if __name__ == "__main__":
    key = jax.random.PRNGKey(0)
    k_p, k_t, k_x, k_y = jax.random.split(key, 4)

    params = init_params(k_p)

    # Small demo batch.
    t = jax.random.uniform(k_t, (N,), jnp.float32)
    x = jax.random.uniform(k_x, (N,), jnp.float32)
    y = jax.random.uniform(k_y, (N,), jnp.float32)

    out = jax.block_until_ready(spinn_forward(t, x, y, params))
    ref = spinn_reference(t, x, y, params)
    assert out.shape == (N,)
    assert jnp.allclose(out, ref, atol=1e-4, rtol=1e-4), (out, ref)

    # Multi-tile / remainder-padded batch exercising the grid path.
    n2 = 300
    k2t, k2x, k2y = jax.random.split(jax.random.fold_in(key, 1), 3)
    t2 = jax.random.uniform(k2t, (n2,), jnp.float32)
    x2 = jax.random.uniform(k2x, (n2,), jnp.float32)
    y2 = jax.random.uniform(k2y, (n2,), jnp.float32)
    out2 = jax.block_until_ready(spinn_forward(t2, x2, y2, params))
    ref2 = spinn_reference(t2, x2, y2, params)
    assert out2.shape == (n2,)
    assert jnp.allclose(out2, ref2, atol=1e-4, rtol=1e-4), (out2, ref2)

    print("KERNEL_OK")
</pallas_src>

<mosaic_0001>
module attributes {stable_mosaic.version = 11 : i64} {
  func.func @spinn_kernel(%arg0: i32, %arg1: memref<8x256xf32, #tpu.memory_space<vmem>>, %arg2: memref<96x8xf32, #tpu.memory_space<vmem>>, %arg3: memref<2x96x97xf32, #tpu.memory_space<vmem>>, %arg4: memref<32x132xf32, #tpu.memory_space<vmem>>, %arg5: memref<1x256xf32, #tpu.memory_space<vmem>>) attributes {dimension_semantics = [#tpu.dimension_semantics<parallel>], iteration_bounds = array<i64: 1>, scalar_prefetch = 0 : i64, scratch_operands = 0 : i64, tpu.core_type = #tpu.core_type<tc>, window_params = [{transform_indices = @transform_0, window_bounds = array<i64: 8, 256>}, {pipeline_mode = #tpu.pipeline_mode<synchronous>, transform_indices = @transform_1, window_bounds = array<i64: 96, 8>}, {pipeline_mode = #tpu.pipeline_mode<synchronous>, transform_indices = @transform_2, window_bounds = array<i64: 2, 96, 97>}, {pipeline_mode = #tpu.pipeline_mode<synchronous>, transform_indices = @transform_3, window_bounds = array<i64: 32, 132>}, {transform_indices = @transform_4, window_bounds = array<i64: 1, 256>}]} {
    %c0 = arith.constant 0 : index
    %c0_0 = arith.constant 0 : index
    %0 = vector.load %arg1[%c0, %c0_0] : memref<8x256xf32, #tpu.memory_space<vmem>>, vector<8x256xf32>
    %c0_1 = arith.constant 0 : index
    %c0_2 = arith.constant 0 : index
    %1 = vector.load %arg2[%c0_1, %c0_2] : memref<96x8xf32, #tpu.memory_space<vmem>>, vector<96x8xf32>
    %cst = arith.constant dense<0.000000e+00> : vector<96x256xf32>
    %2 = tpu.matmul %1, %0, %cst {dimension_numbers = #tpu.dot_dimension_numbers<[1], [0], [0], [1], [0, 0, 1, 1], [], []>} : vector<96x8xf32>, vector<8x256xf32>, vector<96x256xf32> -> vector<96x256xf32>
    %3 = math.tanh %2 : vector<96x256xf32>
    %c0_3 = arith.constant 0 : index
    %c0_4 = arith.constant 0 : index
    %c0_5 = arith.constant 0 : index
    %4 = vector.load %arg3[%c0_3, %c0_4, %c0_5] : memref<2x96x97xf32, #tpu.memory_space<vmem>>, vector<1x96x96xf32>
    %5 = vector.shape_cast %4 : vector<1x96x96xf32> to vector<96x96xf32>
    %c0_6 = arith.constant 0 : index
    %c0_7 = arith.constant 0 : index
    %c96 = arith.constant 96 : index
    %6 = vector.load %arg3[%c0_6, %c0_7, %c96] : memref<2x96x97xf32, #tpu.memory_space<vmem>>, vector<1x96x1xf32>
    %7 = vector.shape_cast %6 : vector<1x96x1xf32> to vector<96x1xf32>
    %cst_8 = arith.constant dense<0.000000e+00> : vector<96x256xf32>
    %8 = tpu.matmul %5, %3, %cst_8 {dimension_numbers = #tpu.dot_dimension_numbers<[1], [0], [0], [1], [0, 0, 1, 1], [], []>} : vector<96x96xf32>, vector<96x256xf32>, vector<96x256xf32> -> vector<96x256xf32>
    %9 = vector.broadcast %7 : vector<96x1xf32> to vector<96x256xf32>
    %10 = arith.addf %8, %9 : vector<96x256xf32>
    %11 = math.tanh %10 : vector<96x256xf32>
    %c1 = arith.constant 1 : index
    %c0_9 = arith.constant 0 : index
    %c0_10 = arith.constant 0 : index
    %12 = vector.load %arg3[%c1, %c0_9, %c0_10] : memref<2x96x97xf32, #tpu.memory_space<vmem>>, vector<1x96x96xf32>
    %13 = vector.shape_cast %12 : vector<1x96x96xf32> to vector<96x96xf32>
    %c1_11 = arith.constant 1 : index
    %c0_12 = arith.constant 0 : index
    %c96_13 = arith.constant 96 : index
    %14 = vector.load %arg3[%c1_11, %c0_12, %c96_13] : memref<2x96x97xf32, #tpu.memory_space<vmem>>, vector<1x96x1xf32>
    %15 = vector.shape_cast %14 : vector<1x96x1xf32> to vector<96x1xf32>
    %cst_14 = arith.constant dense<0.000000e+00> : vector<96x256xf32>
    %16 = tpu.matmul %13, %11, %cst_14 {dimension_numbers = #tpu.dot_dimension_numbers<[1], [0], [0], [1], [0, 0, 1, 1], [], []>} : vector<96x96xf32>, vector<96x256xf32>, vector<96x256xf32> -> vector<96x256xf32>
    %17 = vector.broadcast %15 : vector<96x1xf32> to vector<96x256xf32>
    %18 = arith.addf %16, %17 : vector<96x256xf32>
    %19 = math.tanh %18 : vector<96x256xf32>
    %c0_15 = arith.constant 0 : index
    %c0_16 = arith.constant 0 : index
    %20 = vector.load %arg4[%c0_15, %c0_16] : memref<32x132xf32, #tpu.memory_space<vmem>>, vector<32x132xf32>
    %21 = vector.extract_strided_slice %20 {offsets = [0, 0], sizes = [32, 64], strides = [1, 1]} : vector<32x132xf32> to vector<32x64xf32>
    %22 = vector.extract_strided_slice %20 {offsets = [0, 64], sizes = [32, 32], strides = [1, 1]} : vector<32x132xf32> to vector<32x32xf32>
    %23 = vector.extract_strided_slice %20 {offsets = [0, 96], sizes = [32, 32], strides = [1, 1]} : vector<32x132xf32> to vector<32x32xf32>
    %24 = vector.extract_strided_slice %20 {offsets = [0, 128], sizes = [32, 1], strides = [1, 1]} : vector<32x132xf32> to vector<32x1xf32>
    %25 = vector.extract_strided_slice %20 {offsets = [0, 129], sizes = [32, 1], strides = [1, 1]} : vector<32x132xf32> to vector<32x1xf32>
    %26 = vector.extract_strided_slice %20 {offsets = [0, 130], sizes = [32, 1], strides = [1, 1]} : vector<32x132xf32> to vector<32x1xf32>
    %27 = vector.extract_strided_slice %20 {offsets = [0, 131], sizes = [1, 1], strides = [1, 1]} : vector<32x132xf32> to vector<1x1xf32>
    %28 = vector.extract_strided_slice %19 {offsets = [0, 0], sizes = [64, 256], strides = [1, 1]} : vector<96x256xf32> to vector<64x256xf32>
    %cst_17 = arith.constant dense<0.000000e+00> : vector<32x256xf32>
    %29 = tpu.matmul %21, %28, %cst_17 {dimension_numbers = #tpu.dot_dimension_numbers<[1], [0], [0], [1], [0, 0, 1, 1], [], []>} : vector<32x64xf32>, vector<64x256xf32>, vector<32x256xf32> -> vector<32x256xf32>
    %30 = vector.broadcast %24 : vector<32x1xf32> to vector<32x256xf32>
    %31 = arith.addf %29, %30 : vector<32x256xf32>
    %32 = math.tanh %31 : vector<32x256xf32>
    %cst_18 = arith.constant dense<0.000000e+00> : vector<32x256xf32>
    %33 = tpu.matmul %22, %32, %cst_18 {dimension_numbers = #tpu.dot_dimension_numbers<[1], [0], [0], [1], [0, 0, 1, 1], [], []>} : vector<32x32xf32>, vector<32x256xf32>, vector<32x256xf32> -> vector<32x256xf32>
    %34 = vector.extract_strided_slice %19 {offsets = [64, 0], sizes = [32, 256], strides = [1, 1]} : vector<96x256xf32> to vector<32x256xf32>
    %cst_19 = arith.constant dense<0.000000e+00> : vector<32x256xf32>
    %35 = tpu.matmul %23, %34, %cst_19 {dimension_numbers = #tpu.dot_dimension_numbers<[1], [0], [0], [1], [0, 0, 1, 1], [], []>} : vector<32x32xf32>, vector<32x256xf32>, vector<32x256xf32> -> vector<32x256xf32>
    %36 = arith.addf %33, %35 : vector<32x256xf32>
    %37 = vector.broadcast %25 : vector<32x1xf32> to vector<32x256xf32>
    %38 = arith.addf %36, %37 : vector<32x256xf32>
    %39 = math.tanh %38 : vector<32x256xf32>
    %40 = vector.broadcast %26 : vector<32x1xf32> to vector<32x256xf32>
    %41 = arith.mulf %39, %40 : vector<32x256xf32>
    %cst_20 = arith.constant dense<0.000000e+00> : vector<256xf32>
    %42 = vector.multi_reduction <add>, %41, %cst_20 [0] : vector<32x256xf32> to vector<256xf32>
    %43 = vector.shape_cast %42 : vector<256xf32> to vector<1x256xf32>
    %44 = vector.broadcast %27 : vector<1x1xf32> to vector<1x256xf32>
    %45 = arith.addf %43, %44 : vector<1x256xf32>
    %c0_21 = arith.constant 0 : index
    %c0_22 = arith.constant 0 : index
    %46 = vector.load %arg5[%c0_21, %c0_22] : memref<1x256xf32, #tpu.memory_space<vmem>>, vector<1x256xf32>
    tpu.vector_store %arg5[%c0_21, %c0_22], %45 {strides = array<i32>} : memref<1x256xf32, #tpu.memory_space<vmem>>, vector<1x256xf32>,
    return
  }
  func.func @transform_0(%arg0: i32) -> (i32, i32) {
    %c0_i32 = arith.constant 0 : i32
    %c0_i32_0 = arith.constant 0 : i32
    return %c0_i32, %arg0 : i32, i32
  }
  func.func @transform_1(%arg0: i32) -> (i32, i32) {
    %c0_i32 = arith.constant 0 : i32
    %c0_i32_0 = arith.constant 0 : i32
    %c0_i32_1 = arith.constant 0 : i32
    return %c0_i32, %c0_i32_0 : i32, i32
  }
  func.func @transform_2(%arg0: i32) -> (i32, i32, i32) {
    %c0_i32 = arith.constant 0 : i32
    %c0_i32_0 = arith.constant 0 : i32
    %c0_i32_1 = arith.constant 0 : i32
    %c0_i32_2 = arith.constant 0 : i32
    return %c0_i32, %c0_i32_0, %c0_i32_1 : i32, i32, i32
  }
  func.func @transform_3(%arg0: i32) -> (i32, i32) {
    %c0_i32 = arith.constant 0 : i32
    %c0_i32_0 = arith.constant 0 : i32
    %c0_i32_1 = arith.constant 0 : i32
    return %c0_i32, %c0_i32_0 : i32, i32
  }
  func.func @transform_4(%arg0: i32) -> (i32, i32) {
    %c0_i32 = arith.constant 0 : i32
    %c0_i32_0 = arith.constant 0 : i32
    return %c0_i32, %arg0 : i32, i32
  }
}

</mosaic_0001>

<llo_original>
// kernel: tpu_custom_call.1
$region0: #{tpu_custom_call.1}
  #allocation0 [shape = 'u32[]', space=smem, size = 0x4, offset = 0x4, fixed_abs, tag = 'smem constant byte address 0x4 - core index']
  #allocation1 [shape = 'u32[72,128]{1,0:T(1,128)}', space=vmem, size = 0x9000, scoped, tag = 'internal scratch']
  %s0 = inlined_call_operand.vmem [shape: f32[8,256], index: 0, kind: input, shape index: {}]
  %s1 = inlined_call_operand.vmem [shape: f32[96,8], index: 1, kind: input, shape index: {}]
  %s2 = inlined_call_operand.hbm [shape: f32[2,96,97], index: 2, kind: input, shape index: {}]
  %s3 = inlined_call_operand.vmem [shape: f32[32,132], index: 3, kind: input, shape index: {}]
  %s4 = inlined_call_operand.hbm [shape: f32[1,256], index: 4, kind: output, shape index: {}]
  %s5 = sld [smem:[#allocation0]]
  $region30: #{tpu_custom_call.1} parent=0
    _
  %s7 = ssub.s32 1, %s5
  %s8 = scalar_select 0, %s7, %s5
  $region1: #{tpu_custom_call.1} parent=0
    #allocation2 [shape = 'u8[98304]{0}', space=vmem, size = 0x18000, scoped, tag = 'input window, operand 2, single buffered']
    #allocation3 [shape = 's32[1]{0}', space=sflag, size = 0x4, scoped, tag = 'scoped memory for tpu_custom_call.1']
    #allocation4 [shape = 's32[1]{0}', space=sflag, size = 0x4, scoped, tag = 'scoped memory for tpu_custom_call.1']
    #allocation5 [shape = 'u8[1024]{0}', space=vmem, size = 0x400, scoped, tag = 'output window, operand 0, single buffered']
    %9 = vsyncpa [#allocation3], 0
    %10 = vsyncpa [#allocation4], 0
    // Predicated region
    $region2: #{tpu_custom_call.1} parent=1 // pred_check
      _
    $region3: #{tpu_custom_call.1} parent=1 // pred_check_branch
      %12 = sbr.rel (0) target = $region5
    $region4: #{tpu_custom_call.1} parent=1 // pred_region
      _
    $region5: #{tpu_custom_call.1} parent=1 // pred_fallthru
      _
    // Predicated region
    $region6: #{tpu_custom_call.1} parent=1 // pred_check
      _
    $region7: #{tpu_custom_call.1} parent=1 // pred_check_branch
      %14 = sbr.rel (0) target = $region9
    $region8: #{tpu_custom_call.1} parent=1 // pred_region
      _
    $region9: #{tpu_custom_call.1} parent=1 // pred_fallthru
      _
    // Predicated region
    $region10: #{tpu_custom_call.1} parent=1 // pred_check
      _
    $region11: #{tpu_custom_call.1} parent=1 // pred_check_branch
      %16 = sbr.rel (0) target = $region13
    $region12: #{tpu_custom_call.1} parent=1 // pred_region
      %18 = vsyncadd [#allocation3], 0
      %s19 = sshll.u32 %s2, 4
      %s20 = int_to_ptr.hbm [resolvable:$true] %s19
      %s21 = sshll.u32 [#allocation2], 4
      %s22 = int_to_ptr.vmem [resolvable:$true] %s21
      %27 = dma.hbm_to_vmem [thread:$0]  %s20, 3072, %s22, [#allocation3], 128, 128, 8
    $region13: #{tpu_custom_call.1} parent=1 // pred_fallthru
      _
    // Predicated region
    $region14: #{tpu_custom_call.1} parent=1 // pred_check
      _
    $region15: #{tpu_custom_call.1} parent=1 // pred_check_branch
      %29 = sbr.rel (0) target = $region17
    $region16: #{tpu_custom_call.1} parent=1 // pred_region
      _
    $region17: #{tpu_custom_call.1} parent=1 // pred_fallthru
      _
    // Predicated region
    $region18: #{tpu_custom_call.1} parent=1 // pred_check
      _
    $region19: #{tpu_custom_call.1} parent=1 // pred_check_branch
      %31 = sbr.rel (0) target = $region21
    $region20: #{tpu_custom_call.1} parent=1 // pred_region
      %33 = dma.done [#allocation3], 3072
    $region21: #{tpu_custom_call.1} parent=1 // pred_fallthru
      _
    %v34 = vld [vmem:[%s0] sm:$0xff]
    %v35 = vld [vmem:[%s0 + $0x8] sm:$0xff]
    %v36 = vld [vmem:[%s1] sm:$0xff]
    %v37 = vld [vmem:[%s1 + $0x8] sm:$0xff]
    %v38 = vld [vmem:[%s1 + $0x10] sm:$0xff]
    %v39 = vld [vmem:[%s1 + $0x18] sm:$0xff]
    %v40 = vld [vmem:[%s1 + $0x20] sm:$0xff]
    %v41 = vld [vmem:[%s1 + $0x28] sm:$0xff]
    %v42 = vld [vmem:[%s1 + $0x30] sm:$0xff]
    %v43 = vld [vmem:[%s1 + $0x38] sm:$0xff]
    %v44 = vld [vmem:[%s1 + $0x40] sm:$0xff]
    %v45 = vld [vmem:[%s1 + $0x48] sm:$0xff]
    %v46 = vld [vmem:[%s1 + $0x50] sm:$0xff]
    %v47 = vld [vmem:[%s1 + $0x58] sm:$0xff]
    %vm48 = vcmask 64512
    %v50 = vsel %vm48, %v36, 0
    %v53 = vsel %vm48, %v37, 0
    %v56 = vsel %vm48, %v38, 0
    %v59 = vsel %vm48, %v39, 0
    %v62 = vsel %vm48, %v40, 0
    %v65 = vsel %vm48, %v41, 0
    %v68 = vsel %vm48, %v42, 0
    %v71 = vsel %vm48, %v43, 0
    %v74 = vsel %vm48, %v44, 0
    %v77 = vsel %vm48, %v45, 0
    %v80 = vsel %vm48, %v46, 0
    %v83 = vsel %vm48, %v47, 0
    %85 = vmatpush.msra.mxu0 0.0
    %86 = vmatpush.msra.mxu0 0.0
    %87 = vmatpush.msra.mxu0 0.0
    %88 = vmatpush.msra.mxu0 0.0
    %89 = vmatpush.msra.mxu0 0.0
    %90 = vmatpush.msra.mxu0 0.0
    %91 = vmatpush.msra.mxu0 0.0
    %92 = vmatpush.msra.mxu0 0.0
    %93 = vmatpush.msra.mxu0 0.0
    %94 = vmatpush.msra.mxu0 0.0
    %95 = vmatpush.msra.mxu0 0.0
    %96 = vmatpush.msra.mxu0 0.0
    %97 = vmatpush.msra.mxu0 0.0
    %98 = vmatpush.msra.mxu0 0.0
    %99 = vmatpush.msra.mxu0 0.0
    %100 = vmatpush.msra.mxu0 %v34
    %101 = vmatmul.f32.gmra.mxu0 %v50
    %v102 = vpop.f32.mrf.mxu0
    %v103 = vadd.f32 0.0, %v102
    %104 = vmatmul.f32.gmra.mxu0 %v53
    %v105 = vpop.f32.mrf.mxu0
    %v106 = vadd.f32 0.0, %v105
    %107 = vmatmul.f32.gmra.mxu0 %v56
    %v108 = vpop.f32.mrf.mxu0
    %v109 = vadd.f32 0.0, %v108
    %110 = vmatmul.f32.gmra.mxu0 %v59
    %v111 = vpop.f32.mrf.mxu0
    %v112 = vadd.f32 0.0, %v111
    %113 = vmatmul.f32.gmra.mxu0 %v62
    %v114 = vpop.f32.mrf.mxu0
    %v115 = vadd.f32 0.0, %v114
    %116 = vmatmul.f32.gmra.mxu0 %v65
    %v117 = vpop.f32.mrf.mxu0
    %v118 = vadd.f32 0.0, %v117
    %119 = vmatmul.f32.gmra.mxu0 %v68
    %v120 = vpop.f32.mrf.mxu0
    %v121 = vadd.f32 0.0, %v120
    %122 = vmatmul.f32.gmra.mxu0 %v71
    %v123 = vpop.f32.mrf.mxu0
    %v124 = vadd.f32 0.0, %v123
    %125 = vmatmul.f32.gmra.mxu0 %v74
    %v126 = vpop.f32.mrf.mxu0
    %v127 = vadd.f32 0.0, %v126
    %128 = vmatmul.f32.gmra.mxu0 %v77
    %v129 = vpop.f32.mrf.mxu0
    %v130 = vadd.f32 0.0, %v129
    %131 = vmatmul.f32.gmra.mxu0 %v80
    %v132 = vpop.f32.mrf.mxu0
    %v133 = vadd.f32 0.0, %v132
    %134 = vmatmul.f32.gmra.mxu0 %v83
    %v135 = vpop.f32.mrf.mxu0
    %v136 = vadd.f32 0.0, %v135
    %137 = vdwg.mxu0
    %138 = vmatpush.msra.mxu0 0.0
    %139 = vmatpush.msra.mxu0 0.0
    %140 = vmatpush.msra.mxu0 0.0
    %141 = vmatpush.msra.mxu0 0.0
    %142 = vmatpush.msra.mxu0 0.0
    %143 = vmatpush.msra.mxu0 0.0
    %144 = vmatpush.msra.mxu0 0.0
    %145 = vmatpush.msra.mxu0 0.0
    %146 = vmatpush.msra.mxu0 0.0
    %147 = vmatpush.msra.mxu0 0.0
    %148 = vmatpush.msra.mxu0 0.0
    %149 = vmatpush.msra.mxu0 0.0
    %150 = vmatpush.msra.mxu0 0.0
    %151 = vmatpush.msra.mxu0 0.0
    %152 = vmatpush.msra.mxu0 0.0
    %153 = vmatpush.msra.mxu0 %v35
    %154 = vmatmul.f32.gmra.mxu0 %v50
    %v155 = vpop.f32.mrf.mxu0
    %v156 = vadd.f32 0.0, %v155
    %157 = vmatmul.f32.gmra.mxu0 %v53
    %v158 = vpop.f32.mrf.mxu0
    %v159 = vadd.f32 0.0, %v158
    %160 = vmatmul.f32.gmra.mxu0 %v56
    %v161 = vpop.f32.mrf.mxu0
    %v162 = vadd.f32 0.0, %v161
    %163 = vmatmul.f32.gmra.mxu0 %v59
    %v164 = vpop.f32.mrf.mxu0
    %v165 = vadd.f32 0.0, %v164
    %166 = vmatmul.f32.gmra.mxu0 %v62
    %v167 = vpop.f32.mrf.mxu0
    %v168 = vadd.f32 0.0, %v167
    %169 = vmatmul.f32.gmra.mxu0 %v65
    %v170 = vpop.f32.mrf.mxu0
    %v171 = vadd.f32 0.0, %v170
    %172 = vmatmul.f32.gmra.mxu0 %v68
    %v173 = vpop.f32.mrf.mxu0
    %v174 = vadd.f32 0.0, %v173
    %175 = vmatmul.f32.gmra.mxu0 %v71
    %v176 = vpop.f32.mrf.mxu0
    %v177 = vadd.f32 0.0, %v176
    %178 = vmatmul.f32.gmra.mxu0 %v74
    %v179 = vpop.f32.mrf.mxu0
    %v180 = vadd.f32 0.0, %v179
    %181 = vmatmul.f32.gmra.mxu0 %v77
    %v182 = vpop.f32.mrf.mxu0
    %v183 = vadd.f32 0.0, %v182
    %184 = vmatmul.f32.gmra.mxu0 %v80
    %v185 = vpop.f32.mrf.mxu0
    %v186 = vadd.f32 0.0, %v185
    %187 = vmatmul.f32.gmra.mxu0 %v83
    %v188 = vpop.f32.mrf.mxu0
    %v189 = vadd.f32 0.0, %v188
    %190 = vdwg.mxu0
    %v191 = vtanh.pop %v103
    %v192 = vtanh.pop %v156
    %v193 = vtanh.pop %v106
    %v194 = vtanh.pop %v159
    %v195 = vtanh.pop %v109
    %v196 = vtanh.pop %v162
    %v197 = vtanh.pop %v112
    %v198 = vtanh.pop %v165
    %v199 = vtanh.pop %v115
    %v200 = vtanh.pop %v168
    %v201 = vtanh.pop %v118
    %v202 = vtanh.pop %v171
    %v203 = vtanh.pop %v121
    %v204 = vtanh.pop %v174
    %v205 = vtanh.pop %v124
    %v206 = vtanh.pop %v177
    %v207 = vtanh.pop %v127
    %v208 = vtanh.pop %v180
    %v209 = vtanh.pop %v130
    %v210 = vtanh.pop %v183
    %v211 = vtanh.pop %v133
    %v212 = vtanh.pop %v186
    %v213 = vtanh.pop %v136
    %v214 = vtanh.pop %v189
    %v215 = vld [vmem:[#allocation2] sm:$0xff]
    %v216 = vld [vmem:[#allocation2 + $0x8] sm:$0xff]
    %v217 = vld [vmem:[#allocation2 + $0x10] sm:$0xff]
    %v218 = vld [vmem:[#allocation2 + $0x18] sm:$0xff]
    %v219 = vld [vmem:[#allocation2 + $0x20] sm:$0xff]
    %v220 = vld [vmem:[#allocation2 + $0x28] sm:$0xff]
    %v221 = vld [vmem:[#allocation2 + $0x30] sm:$0xff]
    %v222 = vld [vmem:[#allocation2 + $0x38] sm:$0xff]
    %v223 = vld [vmem:[#allocation2 + $0x40] sm:$0xff]
    %v224 = vld [vmem:[#allocation2 + $0x48] sm:$0xff]
    %v225 = vld [vmem:[#allocation2 + $0x50] sm:$0xff]
    %v226 = vld [vmem:[#allocation2 + $0x58] sm:$0xff]
    %228 = vset.pattern.permute.xlu0 96
    %229 = vperm.xlu0 %228, %v215
    %v230 = vpop.permute.xlu0 %229
    %233 = vset.pattern.permute.xlu0 96
    %234 = vperm.xlu0 %233, %v216
    %v235 = vpop.permute.xlu0 %234
    %238 = vset.pattern.permute.xlu0 96
    %239 = vperm.xlu0 %238, %v217
    %v240 = vpop.permute.xlu0 %239
    %243 = vset.pattern.permute.xlu0 96
    %244 = vperm.xlu0 %243, %v218
    %v245 = vpop.permute.xlu0 %244
    %248 = vset.pattern.permute.xlu0 96
    %249 = vperm.xlu0 %248, %v219
    %v250 = vpop.permute.xlu0 %249
    %253 = vset.pattern.permute.xlu0 96
    %254 = vperm.xlu0 %253, %v220
    %v255 = vpop.permute.xlu0 %254
    %258 = vset.pattern.permute.xlu0 96
    %259 = vperm.xlu0 %258, %v221
    %v260 = vpop.permute.xlu0 %259
    %263 = vset.pattern.permute.xlu0 96
    %264 = vperm.xlu0 %263, %v222
    %v265 = vpop.permute.xlu0 %264
    %268 = vset.pattern.permute.xlu0 96
    %269 = vperm.xlu0 %268, %v223
    %v270 = vpop.permute.xlu0 %269
    %273 = vset.pattern.permute.xlu0 96
    %274 = vperm.xlu0 %273, %v224
    %v275 = vpop.permute.xlu0 %274
    %278 = vset.pattern.permute.xlu0 96
    %279 = vperm.xlu0 %278, %v225
    %v280 = vpop.permute.xlu0 %279
    %283 = vset.pattern.permute.xlu0 96
    %284 = vperm.xlu0 %283, %v226
    %v285 = vpop.permute.xlu0 %284
    %vm287 = vcmask 785408
    %v288 = vsel %vm287, %v215, 0
    %v290 = vsel %vm287, %v216, 0
    %v292 = vsel %vm287, %v217, 0
    %v294 = vsel %vm287, %v218, 0
    %v296 = vsel %vm287, %v219, 0
    %v298 = vsel %vm287, %v220, 0
    %v300 = vsel %vm287, %v221, 0
    %v302 = vsel %vm287, %v222, 0
    %v304 = vsel %vm287, %v223, 0
    %v306 = vsel %vm287, %v224, 0
    %v308 = vsel %vm287, %v225, 0
    %v310 = vsel %vm287, %v226, 0
    %312 = vmatpush.msra.mxu0 0.0
    %313 = vmatpush.msra.mxu0 0.0
    %314 = vmatpush.msra.mxu0 0.0
    %315 = vmatpush.msra.mxu0 0.0
    %316 = vmatpush.msra.mxu0 %v213
    %317 = vmatpush.msra.mxu0 %v211
    %318 = vmatpush.msra.mxu0 %v209
    %319 = vmatpush.msra.mxu0 %v207
    %320 = vmatpush.msra.mxu0 %v205
    %321 = vmatpush.msra.mxu0 %v203
    %322 = vmatpush.msra.mxu0 %v201
    %323 = vmatpush.msra.mxu0 %v199
    %324 = vmatpush.msra.mxu0 %v197
    %325 = vmatpush.msra.mxu0 %v195
    %326 = vmatpush.msra.mxu0 %v193
    %327 = vmatpush.msra.mxu0 %v191
    %328 = vmatmul.f32.gmra.mxu0 %v288
    %v329 = vpop.f32.mrf.mxu0
    %v330 = vadd.f32 %v230, %v329
    %331 = vmatmul.f32.gmra.mxu0 %v290
    %v332 = vpop.f32.mrf.mxu0
    %v333 = vadd.f32 %v235, %v332
    %334 = vmatmul.f32.gmra.mxu0 %v292
    %v335 = vpop.f32.mrf.mxu0
    %v336 = vadd.f32 %v240, %v335
    %337 = vmatmul.f32.gmra.mxu0 %v294
    %v338 = vpop.f32.mrf.mxu0
    %v339 = vadd.f32 %v245, %v338
    %340 = vmatmul.f32.gmra.mxu0 %v296
    %v341 = vpop.f32.mrf.mxu0
    %v342 = vadd.f32 %v250, %v341
    %343 = vmatmul.f32.gmra.mxu0 %v298
    %v344 = vpop.f32.mrf.mxu0
    %v345 = vadd.f32 %v255, %v344
    %346 = vmatmul.f32.gmra.mxu0 %v300
    %v347 = vpop.f32.mrf.mxu0
    %v348 = vadd.f32 %v260, %v347
    %349 = vmatmul.f32.gmra.mxu0 %v302
    %v350 = vpop.f32.mrf.mxu0
    %v351 = vadd.f32 %v265, %v350
    %352 = vmatmul.f32.gmra.mxu0 %v304
    %v353 = vpop.f32.mrf.mxu0
    %v354 = vadd.f32 %v270, %v353
    %355 = vmatmul.f32.gmra.mxu0 %v306
    %v356 = vpop.f32.mrf.mxu0
    %v357 = vadd.f32 %v275, %v356
    %358 = vmatmul.f32.gmra.mxu0 %v308
    %v359 = vpop.f32.mrf.mxu0
    %v360 = vadd.f32 %v280, %v359
    %361 = vmatmul.f32.gmra.mxu0 %v310
    %v362 = vpop.f32.mrf.mxu0
    %v363 = vadd.f32 %v285, %v362
    %364 = vdwg.mxu0
    %365 = vmatpush.msra.mxu0 0.0
    %366 = vmatpush.msra.mxu0 0.0
    %367 = vmatpush.msra.mxu0 0.0
    %368 = vmatpush.msra.mxu0 0.0
    %369 = vmatpush.msra.mxu0 %v214
    %370 = vmatpush.msra.mxu0 %v212
    %371 = vmatpush.msra.mxu0 %v210
    %372 = vmatpush.msra.mxu0 %v208
    %373 = vmatpush.msra.mxu0 %v206
    %374 = vmatpush.msra.mxu0 %v204
    %375 = vmatpush.msra.mxu0 %v202
    %376 = vmatpush.msra.mxu0 %v200
    %377 = vmatpush.msra.mxu0 %v198
    %378 = vmatpush.msra.mxu0 %v196
    %379 = vmatpush.msra.mxu0 %v194
    %380 = vmatpush.msra.mxu0 %v192
    %381 = vmatmul.f32.gmra.mxu0 %v288
    %v382 = vpop.f32.mrf.mxu0
    %v383 = vadd.f32 %v230, %v382
    %384 = vmatmul.f32.gmra.mxu0 %v290
    %v385 = vpop.f32.mrf.mxu0
    %v386 = vadd.f32 %v235, %v385
    %387 = vmatmul.f32.gmra.mxu0 %v292
    %v388 = vpop.f32.mrf.mxu0
    %v389 = vadd.f32 %v240, %v388
    %390 = vmatmul.f32.gmra.mxu0 %v294
    %v391 = vpop.f32.mrf.mxu0
    %v392 = vadd.f32 %v245, %v391
    %393 = vmatmul.f32.gmra.mxu0 %v296
    %v394 = vpop.f32.mrf.mxu0
    %v395 = vadd.f32 %v250, %v394
    %396 = vmatmul.f32.gmra.mxu0 %v298
    %v397 = vpop.f32.mrf.mxu0
    %v398 = vadd.f32 %v255, %v397
    %399 = vmatmul.f32.gmra.mxu0 %v300
    %v400 = vpop.f32.mrf.mxu0
    %v401 = vadd.f32 %v260, %v400
    %402 = vmatmul.f32.gmra.mxu0 %v302
    %v403 = vpop.f32.mrf.mxu0
    %v404 = vadd.f32 %v265, %v403
    %405 = vmatmul.f32.gmra.mxu0 %v304
    %v406 = vpop.f32.mrf.mxu0
    %v407 = vadd.f32 %v270, %v406
    %408 = vmatmul.f32.gmra.mxu0 %v306
    %v409 = vpop.f32.mrf.mxu0
    %v410 = vadd.f32 %v275, %v409
    %411 = vmatmul.f32.gmra.mxu0 %v308
    %v412 = vpop.f32.mrf.mxu0
    %v413 = vadd.f32 %v280, %v412
    %414 = vmatmul.f32.gmra.mxu0 %v310
    %v415 = vpop.f32.mrf.mxu0
    %v416 = vadd.f32 %v285, %v415
    %417 = vdwg.mxu0
    %v418 = vtanh.pop %v330
    %v419 = vtanh.pop %v383
    %v420 = vtanh.pop %v333
    %v421 = vtanh.pop %v386
    %v422 = vtanh.pop %v336
    %v423 = vtanh.pop %v389
    %v424 = vtanh.pop %v339
    %v425 = vtanh.pop %v392
    %v426 = vtanh.pop %v342
    %v427 = vtanh.pop %v395
    %v428 = vtanh.pop %v345
    %v429 = vtanh.pop %v398
    %v430 = vtanh.pop %v348
    %v431 = vtanh.pop %v401
    %v432 = vtanh.pop %v351
    %v433 = vtanh.pop %v404
    %v434 = vtanh.pop %v354
    %v435 = vtanh.pop %v407
    %v436 = vtanh.pop %v357
    %v437 = vtanh.pop %v410
    %v438 = vtanh.pop %v360
    %v439 = vtanh.pop %v413
    %v440 = vtanh.pop %v363
    %v441 = vtanh.pop %v416
    %s442 = scalar_lea.vmem [#allocation2], 96
    %v443 = vld [vmem:[%s442] sm:$0xff]
    %v444 = vld [vmem:[%s442 + $0x8] sm:$0xff]
    %v445 = vld [vmem:[%s442 + $0x10] sm:$0xff]
    %v446 = vld [vmem:[%s442 + $0x18] sm:$0xff]
    %v447 = vld [vmem:[%s442 + $0x20] sm:$0xff]
    %v448 = vld [vmem:[%s442 + $0x28] sm:$0xff]
    %v449 = vld [vmem:[%s442 + $0x30] sm:$0xff]
    %v450 = vld [vmem:[%s442 + $0x38] sm:$0xff]
    %v451 = vld [vmem:[%s442 + $0x40] sm:$0xff]
    %v452 = vld [vmem:[%s442 + $0x48] sm:$0xff]
    %v453 = vld [vmem:[%s442 + $0x50] sm:$0xff]
    %v454 = vld [vmem:[%s442 + $0x58] sm:$0xff]
    %456 = vset.pattern.permute.xlu0 96
    %457 = vperm.xlu0 %456, %v443
    %v458 = vpop.permute.xlu0 %457
    %461 = vset.pattern.permute.xlu0 96
    %462 = vperm.xlu0 %461, %v444
    %v463 = vpop.permute.xlu0 %462
    %466 = vset.pattern.permute.xlu0 96
    %467 = vperm.xlu0 %466, %v445
    %v468 = vpop.permute.xlu0 %467
    %471 = vset.pattern.permute.xlu0 96
    %472 = vperm.xlu0 %471, %v446
    %v473 = vpop.permute.xlu0 %472
    %476 = vset.pattern.permute.xlu0 96
    %477 = vperm.xlu0 %476, %v447
    %v478 = vpop.permute.xlu0 %477
    %481 = vset.pattern.permute.xlu0 96
    %482 = vperm.xlu0 %481, %v448
    %v483 = vpop.permute.xlu0 %482
    %486 = vset.pattern.permute.xlu0 96
    %487 = vperm.xlu0 %486, %v449
    %v488 = vpop.permute.xlu0 %487
    %491 = vset.pattern.permute.xlu0 96
    %492 = vperm.xlu0 %491, %v450
    %v493 = vpop.permute.xlu0 %492
    %496 = vset.pattern.permute.xlu0 96
    %497 = vperm.xlu0 %496, %v451
    %v498 = vpop.permute.xlu0 %497
    %501 = vset.pattern.permute.xlu0 96
    %502 = vperm.xlu0 %501, %v452
    %v503 = vpop.permute.xlu0 %502
    %506 = vset.pattern.permute.xlu0 96
    %507 = vperm.xlu0 %506, %v453
    %v508 = vpop.permute.xlu0 %507
    %511 = vset.pattern.permute.xlu0 96
    %512 = vperm.xlu0 %511, %v454
    %v513 = vpop.permute.xlu0 %512
    %v515 = vsel %vm287, %v443, 0
    %v517 = vsel %vm287, %v444, 0
    %v519 = vsel %vm287, %v445, 0
    %v521 = vsel %vm287, %v446, 0
    %v523 = vsel %vm287, %v447, 0
    %v525 = vsel %vm287, %v448, 0
    %v527 = vsel %vm287, %v449, 0
    %v529 = vsel %vm287, %v450, 0
    %v531 = vsel %vm287, %v451, 0
    %v533 = vsel %vm287, %v452, 0
    %v535 = vsel %vm287, %v453, 0
    %v537 = vsel %vm287, %v454, 0
    %539 = vmatpush.msra.mxu0 0.0
    %540 = vmatpush.msra.mxu0 0.0
    %541 = vmatpush.msra.mxu0 0.0
    %542 = vmatpush.msra.mxu0 0.0
    %543 = vmatpush.msra.mxu0 %v440
    %544 = vmatpush.msra.mxu0 %v438
    %545 = vmatpush.msra.mxu0 %v436
    %546 = vmatpush.msra.mxu0 %v434
    %547 = vmatpush.msra.mxu0 %v432
    %548 = vmatpush.msra.mxu0 %v430
    %549 = vmatpush.msra.mxu0 %v428
    %550 = vmatpush.msra.mxu0 %v426
    %551 = vmatpush.msra.mxu0 %v424
    %552 = vmatpush.msra.mxu0 %v422
    %553 = vmatpush.msra.mxu0 %v420
    %554 = vmatpush.msra.mxu0 %v418
    %555 = vmatmul.f32.gmra.mxu0 %v515
    %v556 = vpop.f32.mrf.mxu0
    %v557 = vadd.f32 %v458, %v556
    %558 = vmatmul.f32.gmra.mxu0 %v517
    %v559 = vpop.f32.mrf.mxu0
    %v560 = vadd.f32 %v463, %v559
    %561 = vmatmul.f32.gmra.mxu0 %v519
    %v562 = vpop.f32.mrf.mxu0
    %v563 = vadd.f32 %v468, %v562
    %564 = vmatmul.f32.gmra.mxu0 %v521
    %v565 = vpop.f32.mrf.mxu0
    %v566 = vadd.f32 %v473, %v565
    %567 = vmatmul.f32.gmra.mxu0 %v523
    %v568 = vpop.f32.mrf.mxu0
    %v569 = vadd.f32 %v478, %v568
    %570 = vmatmul.f32.gmra.mxu0 %v525
    %v571 = vpop.f32.mrf.mxu0
    %v572 = vadd.f32 %v483, %v571
    %573 = vmatmul.f32.gmra.mxu0 %v527
    %v574 = vpop.f32.mrf.mxu0
    %v575 = vadd.f32 %v488, %v574
    %576 = vmatmul.f32.gmra.mxu0 %v529
    %v577 = vpop.f32.mrf.mxu0
    %v578 = vadd.f32 %v493, %v577
    %579 = vmatmul.f32.gmra.mxu0 %v531
    %v580 = vpop.f32.mrf.mxu0
    %v581 = vadd.f32 %v498, %v580
    %582 = vmatmul.f32.gmra.mxu0 %v533
    %v583 = vpop.f32.mrf.mxu0
    %v584 = vadd.f32 %v503, %v583
    %585 = vmatmul.f32.gmra.mxu0 %v535
    %v586 = vpop.f32.mrf.mxu0
    %v587 = vadd.f32 %v508, %v586
    %588 = vmatmul.f32.gmra.mxu0 %v537
    %v589 = vpop.f32.mrf.mxu0
    %v590 = vadd.f32 %v513, %v589
    %591 = vdwg.mxu0
    %592 = vmatpush.msra.mxu0 0.0
    %593 = vmatpush.msra.mxu0 0.0
    %594 = vmatpush.msra.mxu0 0.0
    %595 = vmatpush.msra.mxu0 0.0
    %596 = vmatpush.msra.mxu0 %v441
    %597 = vmatpush.msra.mxu0 %v439
    %598 = vmatpush.msra.mxu0 %v437
    %599 = vmatpush.msra.mxu0 %v435
    %600 = vmatpush.msra.mxu0 %v433
    %601 = vmatpush.msra.mxu0 %v431
    %602 = vmatpush.msra.mxu0 %v429
    %603 = vmatpush.msra.mxu0 %v427
    %604 = vmatpush.msra.mxu0 %v425
    %605 = vmatpush.msra.mxu0 %v423
    %606 = vmatpush.msra.mxu0 %v421
    %607 = vmatpush.msra.mxu0 %v419
    %608 = vmatmul.f32.gmra.mxu0 %v515
    %v609 = vpop.f32.mrf.mxu0
    %v610 = vadd.f32 %v458, %v609
    %611 = vmatmul.f32.gmra.mxu0 %v517
    %v612 = vpop.f32.mrf.mxu0
    %v613 = vadd.f32 %v463, %v612
    %614 = vmatmul.f32.gmra.mxu0 %v519
    %v615 = vpop.f32.mrf.mxu0
    %v616 = vadd.f32 %v468, %v615
    %617 = vmatmul.f32.gmra.mxu0 %v521
    %v618 = vpop.f32.mrf.mxu0
    %v619 = vadd.f32 %v473, %v618
    %620 = vmatmul.f32.gmra.mxu0 %v523
    %v621 = vpop.f32.mrf.mxu0
    %v622 = vadd.f32 %v478, %v621
    %623 = vmatmul.f32.gmra.mxu0 %v525
    %v624 = vpop.f32.mrf.mxu0
    %v625 = vadd.f32 %v483, %v624
    %626 = vmatmul.f32.gmra.mxu0 %v527
    %v627 = vpop.f32.mrf.mxu0
    %v628 = vadd.f32 %v488, %v627
    %629 = vmatmul.f32.gmra.mxu0 %v529
    %v630 = vpop.f32.mrf.mxu0
    %v631 = vadd.f32 %v493, %v630
    %632 = vmatmul.f32.gmra.mxu0 %v531
    %v633 = vpop.f32.mrf.mxu0
    %v634 = vadd.f32 %v498, %v633
    %635 = vmatmul.f32.gmra.mxu0 %v533
    %v636 = vpop.f32.mrf.mxu0
    %v637 = vadd.f32 %v503, %v636
    %638 = vmatmul.f32.gmra.mxu0 %v535
    %v639 = vpop.f32.mrf.mxu0
    %v640 = vadd.f32 %v508, %v639
    %641 = vmatmul.f32.gmra.mxu0 %v537
    %v642 = vpop.f32.mrf.mxu0
    %v643 = vadd.f32 %v513, %v642
    %644 = vdwg.mxu0
    %v645 = vtanh.pop %v557
    %v646 = vtanh.pop %v610
    %v647 = vtanh.pop %v560
    %v648 = vtanh.pop %v613
    %v649 = vtanh.pop %v563
    %v650 = vtanh.pop %v616
    %v651 = vtanh.pop %v566
    %v652 = vtanh.pop %v619
    %v653 = vtanh.pop %v569
    %v654 = vtanh.pop %v622
    %v655 = vtanh.pop %v572
    %v656 = vtanh.pop %v625
    %v657 = vtanh.pop %v575
    %v658 = vtanh.pop %v628
    %v659 = vtanh.pop %v578
    %v660 = vtanh.pop %v631
    %v661 = vtanh.pop %v581
    %v662 = vtanh.pop %v634
    %v663 = vtanh.pop %v584
    %v664 = vtanh.pop %v637
    %v665 = vtanh.pop %v587
    %v666 = vtanh.pop %v640
    %v667 = vtanh.pop %v590
    %v668 = vtanh.pop %v643
    %v669 = vld [vmem:[%s3] sm:$0xff]
    %v670 = vld [vmem:[%s3 + $0x8] sm:$0xff]
    %v671 = vld [vmem:[%s3 + $0x10] sm:$0xff]
    %v672 = vld [vmem:[%s3 + $0x18] sm:$0xff]
    %v673 = vld [vmem:[%s3 + $0x20] sm:$0xff]
    %v674 = vld [vmem:[%s3 + $0x28] sm:$0xff]
    %v675 = vld [vmem:[%s3 + $0x30] sm:$0xff]
    %v676 = vld [vmem:[%s3 + $0x38] sm:$0xff]
    %678 = vset.pattern.permute.xlu0 0
    %679 = vperm.xlu0 %678, %v670
    %v680 = vpop.permute.xlu0 %679
    %683 = vset.pattern.permute.xlu0 0
    %684 = vperm.xlu0 %683, %v672
    %v685 = vpop.permute.xlu0 %684
    %688 = vset.pattern.permute.xlu0 0
    %689 = vperm.xlu0 %688, %v674
    %v690 = vpop.permute.xlu0 %689
    %693 = vset.pattern.permute.xlu0 0
    %694 = vperm.xlu0 %693, %v676
    %v695 = vpop.permute.xlu0 %694
    %vm697 = vcmask 523264
    %v699 = vsel %vm697, %v669, 0
    %v702 = vsel %vm697, %v671, 0
    %v705 = vsel %vm697, %v673, 0
    %v708 = vsel %vm697, %v675, 0
    %710 = vmatpush.msra.mxu0 0.0
    %711 = vmatpush.msra.mxu0 0.0
    %712 = vmatpush.msra.mxu0 0.0
    %713 = vmatpush.msra.mxu0 0.0
    %714 = vmatpush.msra.mxu0 0.0
    %715 = vmatpush.msra.mxu0 0.0
    %716 = vmatpush.msra.mxu0 0.0
    %717 = vmatpush.msra.mxu0 0.0
    %718 = vmatpush.msra.mxu0 %v659
    %719 = vmatpush.msra.mxu0 %v657
    %720 = vmatpush.msra.mxu0 %v655
    %721 = vmatpush.msra.mxu0 %v653
    %722 = vmatpush.msra.mxu0 %v651
    %723 = vmatpush.msra.mxu0 %v649
    %724 = vmatpush.msra.mxu0 %v647
    %725 = vmatpush.msra.mxu0 %v645
    %726 = vmatmul.f32.gmra.mxu0 %v699
    %v727 = vpop.f32.mrf.mxu0
    %v728 = vadd.f32 %v680, %v727
    %729 = vmatmul.f32.gmra.mxu0 %v702
    %v730 = vpop.f32.mrf.mxu0
    %v731 = vadd.f32 %v685, %v730
    %732 = vmatmul.f32.gmra.mxu0 %v705
    %v733 = vpop.f32.mrf.mxu0
    %v734 = vadd.f32 %v690, %v733
    %735 = vmatmul.f32.gmra.mxu0 %v708
    %v736 = vpop.f32.mrf.mxu0
    %v737 = vadd.f32 %v695, %v736
    %738 = vdwg.mxu0
    %739 = vmatpush.msra.mxu0 0.0
    %740 = vmatpush.msra.mxu0 0.0
    %741 = vmatpush.msra.mxu0 0.0
    %742 = vmatpush.msra.mxu0 0.0
    %743 = vmatpush.msra.mxu0 0.0
    %744 = vmatpush.msra.mxu0 0.0
    %745 = vmatpush.msra.mxu0 0.0
    %746 = vmatpush.msra.mxu0 0.0
    %747 = vmatpush.msra.mxu0 %v660
    %748 = vmatpush.msra.mxu0 %v658
    %749 = vmatpush.msra.mxu0 %v656
    %750 = vmatpush.msra.mxu0 %v654
    %751 = vmatpush.msra.mxu0 %v652
    %752 = vmatpush.msra.mxu0 %v650
    %753 = vmatpush.msra.mxu0 %v648
    %754 = vmatpush.msra.mxu0 %v646
    %755 = vmatmul.f32.gmra.mxu0 %v699
    %v756 = vpop.f32.mrf.mxu0
    %v757 = vadd.f32 %v680, %v756
    %758 = vmatmul.f32.gmra.mxu0 %v702
    %v759 = vpop.f32.mrf.mxu0
    %v760 = vadd.f32 %v685, %v759
    %761 = vmatmul.f32.gmra.mxu0 %v705
    %v762 = vpop.f32.mrf.mxu0
    %v763 = vadd.f32 %v690, %v762
    %764 = vmatmul.f32.gmra.mxu0 %v708
    %v765 = vpop.f32.mrf.mxu0
    %v766 = vadd.f32 %v695, %v765
    %767 = vdwg.mxu0
    %v768 = vtanh.pop %v728
    %v769 = vtanh.pop %v757
    %v770 = vtanh.pop %v731
    %v771 = vtanh.pop %v760
    %v772 = vtanh.pop %v734
    %v773 = vtanh.pop %v763
    %v774 = vtanh.pop %v737
    %v775 = vtanh.pop %v766
    %776 = vrot.lane.b32.xlu0 %v669, 32
    %v777 = vpop.permute.xlu0 %776
    %778 = vrot.lane.b32.xlu0 %v671, 32
    %v779 = vpop.permute.xlu0 %778
    %780 = vrot.lane.b32.xlu0 %v673, 32
    %v781 = vpop.permute.xlu0 %780
    %782 = vrot.lane.b32.xlu0 %v675, 32
    %v783 = vpop.permute.xlu0 %782
    %vm784 = vcmask 261120
    %v785 = vsel %vm784, %v777, 0
    %v787 = vsel %vm784, %v779, 0
    %v789 = vsel %vm784, %v781, 0
    %v791 = vsel %vm784, %v783, 0
    %793 = vmatpush.msra.mxu0 0.0
    %794 = vmatpush.msra.mxu0 0.0
    %795 = vmatpush.msra.mxu0 0.0
    %796 = vmatpush.msra.mxu0 0.0
    %797 = vmatpush.msra.mxu0 0.0
    %798 = vmatpush.msra.mxu0 0.0
    %799 = vmatpush.msra.mxu0 0.0
    %800 = vmatpush.msra.mxu0 0.0
    %801 = vmatpush.msra.mxu0 0.0
    %802 = vmatpush.msra.mxu0 0.0
    %803 = vmatpush.msra.mxu0 0.0
    %804 = vmatpush.msra.mxu0 0.0
    %805 = vmatpush.msra.mxu0 %v667
    %806 = vmatpush.msra.mxu0 %v665
    %807 = vmatpush.msra.mxu0 %v663
    %808 = vmatpush.msra.mxu0 %v661
    %809 = vmatmul.f32.gmra.mxu0 %v785
    %v810 = vpop.f32.mrf.mxu0
    %v811 = vadd.f32 0.0, %v810
    %812 = vmatmul.f32.gmra.mxu0 %v787
    %v813 = vpop.f32.mrf.mxu0
    %v814 = vadd.f32 0.0, %v813
    %815 = vmatmul.f32.gmra.mxu0 %v789
    %v816 = vpop.f32.mrf.mxu0
    %v817 = vadd.f32 0.0, %v816
    %818 = vmatmul.f32.gmra.mxu0 %v791
    %v819 = vpop.f32.mrf.mxu0
    %v820 = vadd.f32 0.0, %v819
    %821 = vdwg.mxu0
    %822 = vmatpush.msra.mxu0 0.0
    %823 = vmatpush.msra.mxu0 0.0
    %824 = vmatpush.msra.mxu0 0.0
    %825 = vmatpush.msra.mxu0 0.0
    %826 = vmatpush.msra.mxu0 0.0
    %827 = vmatpush.msra.mxu0 0.0
    %828 = vmatpush.msra.mxu0 0.0
    %829 = vmatpush.msra.mxu0 0.0
    %830 = vmatpush.msra.mxu0 0.0
    %831 = vmatpush.msra.mxu0 0.0
    %832 = vmatpush.msra.mxu0 0.0
    %833 = vmatpush.msra.mxu0 0.0
    %834 = vmatpush.msra.mxu0 %v668
    %835 = vmatpush.msra.mxu0 %v666
    %836 = vmatpush.msra.mxu0 %v664
    %837 = vmatpush.msra.mxu0 %v662
    %838 = vmatmul.f32.gmra.mxu0 %v785
    %v839 = vpop.f32.mrf.mxu0
    %v840 = vadd.f32 0.0, %v839
    %841 = vmatmul.f32.gmra.mxu0 %v787
    %v842 = vpop.f32.mrf.mxu0
    %v843 = vadd.f32 0.0, %v842
    %844 = vmatmul.f32.gmra.mxu0 %v789
    %v845 = vpop.f32.mrf.mxu0
    %v846 = vadd.f32 0.0, %v845
    %847 = vmatmul.f32.gmra.mxu0 %v791
    %v848 = vpop.f32.mrf.mxu0
    %v849 = vadd.f32 0.0, %v848
    %850 = vdwg.mxu0
    %851 = vrot.lane.b32.xlu0 %v669, 64
    %v852 = vpop.permute.xlu0 %851
    %853 = vrot.lane.b32.xlu0 %v671, 64
    %v854 = vpop.permute.xlu0 %853
    %855 = vrot.lane.b32.xlu0 %v673, 64
    %v856 = vpop.permute.xlu0 %855
    %857 = vrot.lane.b32.xlu0 %v675, 64
    %v858 = vpop.permute.xlu0 %857
    %v859 = vsel %vm784, %v852, 0
    %v861 = vsel %vm784, %v854, 0
    %v863 = vsel %vm784, %v856, 0
    %v865 = vsel %vm784, %v858, 0
    %867 = vmatpush.msra.mxu0 0.0
    %868 = vmatpush.msra.mxu0 0.0
    %869 = vmatpush.msra.mxu0 0.0
    %870 = vmatpush.msra.mxu0 0.0
    %871 = vmatpush.msra.mxu0 0.0
    %872 = vmatpush.msra.mxu0 0.0
    %873 = vmatpush.msra.mxu0 0.0
    %874 = vmatpush.msra.mxu0 0.0
    %875 = vmatpush.msra.mxu0 0.0
    %876 = vmatpush.msra.mxu0 0.0
    %877 = vmatpush.msra.mxu0 0.0
    %878 = vmatpush.msra.mxu0 0.0
    %879 = vmatpush.msra.mxu0 %v774
    %880 = vmatpush.msra.mxu0 %v772
    %881 = vmatpush.msra.mxu0 %v770
    %882 = vmatpush.msra.mxu0 %v768
    %883 = vmatmul.f32.gmra.mxu0 %v859
    %v884 = vpop.f32.mrf.mxu0
    %v885 = vadd.f32 %v811, %v884
    %886 = vmatmul.f32.gmra.mxu0 %v861
    %v887 = vpop.f32.mrf.mxu0
    %v888 = vadd.f32 %v814, %v887
    %889 = vmatmul.f32.gmra.mxu0 %v863
    %v890 = vpop.f32.mrf.mxu0
    %v891 = vadd.f32 %v817, %v890
    %892 = vmatmul.f32.gmra.mxu0 %v865
    %v893 = vpop.f32.mrf.mxu0
    %v894 = vadd.f32 %v820, %v893
    %895 = vdwg.mxu0
    %896 = vmatpush.msra.mxu0 0.0
    %897 = vmatpush.msra.mxu0 0.0
    %898 = vmatpush.msra.mxu0 0.0
    %899 = vmatpush.msra.mxu0 0.0
    %900 = vmatpush.msra.mxu0 0.0
    %901 = vmatpush.msra.mxu0 0.0
    %902 = vmatpush.msra.mxu0 0.0
    %903 = vmatpush.msra.mxu0 0.0
    %904 = vmatpush.msra.mxu0 0.0
    %905 = vmatpush.msra.mxu0 0.0
    %906 = vmatpush.msra.mxu0 0.0
    %907 = vmatpush.msra.mxu0 0.0
    %908 = vmatpush.msra.mxu0 %v775
    %909 = vmatpush.msra.mxu0 %v773
    %910 = vmatpush.msra.mxu0 %v771
    %911 = vmatpush.msra.mxu0 %v769
    %912 = vmatmul.f32.gmra.mxu0 %v859
    %v913 = vpop.f32.mrf.mxu0
    %v914 = vadd.f32 %v840, %v913
    %915 = vmatmul.f32.gmra.mxu0 %v861
    %v916 = vpop.f32.mrf.mxu0
    %v917 = vadd.f32 %v843, %v916
    %918 = vmatmul.f32.gmra.mxu0 %v863
    %v919 = vpop.f32.mrf.mxu0
    %v920 = vadd.f32 %v846, %v919
    %921 = vmatmul.f32.gmra.mxu0 %v865
    %v922 = vpop.f32.mrf.mxu0
    %v923 = vadd.f32 %v849, %v922
    %924 = vdwg.mxu0
    %925 = vset.pattern.permute.xlu0 1
    %926 = vperm.xlu0 %925, %v670
    %v927 = vpop.permute.xlu0 %926
    %929 = vset.pattern.permute.xlu0 1
    %930 = vperm.xlu0 %929, %v672
    %v931 = vpop.permute.xlu0 %930
    %933 = vset.pattern.permute.xlu0 1
    %934 = vperm.xlu0 %933, %v674
    %v935 = vpop.permute.xlu0 %934
    %937 = vset.pattern.permute.xlu0 1
    %938 = vperm.xlu0 %937, %v676
    %v939 = vpop.permute.xlu0 %938
    %v941 = vadd.f32 %v885, %v927
    %v942 = vadd.f32 %v914, %v927
    %v943 = vadd.f32 %v888, %v931
    %v944 = vadd.f32 %v917, %v931
    %v945 = vadd.f32 %v891, %v935
    %v946 = vadd.f32 %v920, %v935
    %v947 = vadd.f32 %v894, %v939
    %v948 = vadd.f32 %v923, %v939
    %v949 = vtanh.pop %v941
    %v950 = vtanh.pop %v942
    %v951 = vtanh.pop %v943
    %v952 = vtanh.pop %v944
    %v953 = vtanh.pop %v945
    %v954 = vtanh.pop %v946
    %v955 = vtanh.pop %v947
    %v956 = vtanh.pop %v948
    %957 = vset.pattern.permute.xlu0 2
    %958 = vperm.xlu0 %957, %v670
    %v959 = vpop.permute.xlu0 %958
    %961 = vset.pattern.permute.xlu0 2
    %962 = vperm.xlu0 %961, %v672
    %v963 = vpop.permute.xlu0 %962
    %965 = vset.pattern.permute.xlu0 2
    %966 = vperm.xlu0 %965, %v674
    %v967 = vpop.permute.xlu0 %966
    %969 = vset.pattern.permute.xlu0 2
    %970 = vperm.xlu0 %969, %v676
    %v971 = vpop.permute.xlu0 %970
    %v973 = vmul.f32 %v949, %v959
    %v974 = vmul.f32 %v950, %v959
    %v975 = vmul.f32 %v951, %v963
    %v976 = vmul.f32 %v952, %v963
    %v977 = vmul.f32 %v953, %v967
    %v978 = vmul.f32 %v954, %v967
    %v979 = vmul.f32 %v955, %v971
    %v980 = vmul.f32 %v956, %v971
    %v981 = vadd.f32 %v973, %v975
    %v982 = vadd.f32 %v981, %v977
    %v983 = vadd.f32 %v982, %v979
    %v984 = vrot.slane %v983, 4
    %v985 = vadd.f32 %v983, %v984
    %v986 = vrot.slane %v985, 2
    %v987 = vadd.f32 %v985, %v986
    %v988 = vrot.slane %v987, 1
    %v989 = vadd.f32 %v987, %v988
    %v990 = vadd.f32 %v974, %v976
    %v991 = vadd.f32 %v990, %v978
    %v992 = vadd.f32 %v991, %v980
    %v993 = vrot.slane %v992, 4
    %v994 = vadd.f32 %v992, %v993
    %v995 = vrot.slane %v994, 2
    %v996 = vadd.f32 %v994, %v995
    %v997 = vrot.slane %v996, 1
    %v998 = vadd.f32 %v996, %v997
    %999 = vset.pattern.permute.xlu0 3
    %1000 = vperm.xlu0 %999, %v670
    %v1001 = vpop.permute.xlu0 %1000
    %v1003 = vadd.f32 %v989, %v1001
    %v1004 = vadd.f32 %v998, %v1001
    %v1007 = vrot.slane %v1004, 7
    %vm1008 = vcmask 1040384
    %v1009 = vsel %vm1008, %v1003, %v1007
    %v1011 = vlaneseq
    %vm1012 = vcmp.ge.s32.totalorder %v1011, 0
    %vm1013 = vcmp.lt.s32.totalorder %v1011, 256
    %vm1014 = vmand %vm1012, %vm1013
    %1015 = vst.msk [vmem:[#allocation5] sm:$0x3] %vm1014, %v1009
    // Predicated region
    $region22: #{tpu_custom_call.1} parent=1 // pred_check
      _
    $region23: #{tpu_custom_call.1} parent=1 // pred_check_branch
      %1017 = sbr.rel (0) target = $region25
    $region24: #{tpu_custom_call.1} parent=1 // pred_region
      %1019 = vsyncadd [#allocation4], 0
      %s1021 = sshll.u32 [#allocation5], 4
      %s1022 = int_to_ptr.vmem [resolvable:$true] %s1021
      %s1023 = sshll.u32 %s4, 4
      %s1024 = int_to_ptr.hbm [resolvable:$true] %s1023
      %1026 = dma.vmem_to_hbm [thread:$0]  %s1022, 32, %s1024, [#allocation4]
    $region25: #{tpu_custom_call.1} parent=1 // pred_fallthru
      _
    // Predicated region
    $region26: #{tpu_custom_call.1} parent=1 // pred_check
      _
    $region27: #{tpu_custom_call.1} parent=1 // pred_check_branch
      %1028 = sbr.rel (0) target = $region29
    $region28: #{tpu_custom_call.1} parent=1 // pred_region
      %1030 = dma.done [#allocation4], 32
    $region29: #{tpu_custom_call.1} parent=1 // pred_fallthru
      _
    %1031 = vsyncpa [#allocation3], 1
    %1032 = vsyncpa [#allocation4], 1

</llo_original>
